<compile_context>
chip_gen: v7x
topology: tpu7x:2x2x1
jax: 0.10.0
libtpu: 0.0.40
codegen_flags: <defaults>
</compile_context>

<pallas_src>
import functools

import jax
import jax.numpy as jnp
from jax.experimental import pallas as pl
from jax.experimental.pallas import tpu as pltpu

_LANE = 128
_TB_MAX = 512  # batch tile cap: keeps h1/h2 intermediates in vregs (no spill)


def _round_up(x, m):
    return ((x + m - 1) // m) * m


def _mlp_kernel(x_ref, w1_ref, b1_ref, w2_ref, b2_ref, w3_ref, b3_ref, o_ref):
    # x tile [TB, in_dim] bf16; weights bf16; biases f32.
    # MXU matmuls accumulate in f32; bias add + ReLU in f32 (no bf16 VPU ops).
    x = x_ref[...]
    h1 = jnp.dot(x, w1_ref[...], preferred_element_type=jnp.float32) + b1_ref[...]
    h1 = jnp.maximum(h1, 0.0).astype(jnp.bfloat16)
    h2 = jnp.dot(h1, w2_ref[...], preferred_element_type=jnp.float32) + b2_ref[...]
    h2 = jnp.maximum(h2, 0.0).astype(jnp.bfloat16)
    out = jnp.dot(h2, w3_ref[...], preferred_element_type=jnp.float32) + b3_ref[...]
    o_ref[...] = out.astype(o_ref.dtype)  # [TB, out_pad] lane-dense store


@functools.partial(jax.jit, static_argnames=("tb_max",))
def feedforward_nn(obs, params, tb_max=_TB_MAX):
    """obs: [B, in_dim] f32; params: w1,b1,w2,b2,w3,b3 with w=[in,out], b=[1,out]."""
    w1, b1 = params["w1"], params["b1"]
    w2, b2 = params["w2"], params["b2"]
    w3, b3 = params["w3"], params["b3"]

    B, in_dim = obs.shape
    out_dim = w3.shape[1]
    out_pad = _round_up(out_dim, _LANE)  # lane-dense output slab

    # bf16 operands for the MXU; biases stay f32.
    x = obs.astype(jnp.bfloat16)
    w1b = w1.astype(jnp.bfloat16)
    w2b = w2.astype(jnp.bfloat16)
    # Zero-pad layer-3 columns so the output store is unmasked (128-lane dense).
    w3b = jnp.pad(w3, ((0, 0), (0, out_pad - out_dim))).astype(jnp.bfloat16)
    b3p = jnp.pad(b3, ((0, 0), (0, out_pad - out_dim)))

    # Batch tile (multiple of 8); pad B so the grid divides evenly.
    tb = min(tb_max, _round_up(B, 8))
    b_pad = _round_up(B, tb)
    if b_pad != B:
        x = jnp.pad(x, ((0, b_pad - B), (0, 0)))

    const = lambda shape: pl.BlockSpec(shape, lambda i: (0,) * len(shape))

    out = pl.pallas_call(
        _mlp_kernel,
        out_shape=jax.ShapeDtypeStruct((b_pad, out_pad), jnp.float32),
        grid=(b_pad // tb,),
        in_specs=[
            pl.BlockSpec((tb, in_dim), lambda i: (i, 0)),  # obs: tiled over batch
            const(w1b.shape), const(b1.shape),             # weights/biases resident
            const(w2b.shape), const(b2.shape),
            const(w3b.shape), const(b3p.shape),
        ],
        out_specs=pl.BlockSpec((tb, out_pad), lambda i: (i, 0)),
        compiler_params=pltpu.CompilerParams(
            dimension_semantics=("parallel",),  # dual-TC sharding on v7x; no-op v5e/v6e
        ),
    )(x, w1b, b1, w2b, b2, w3b, b3p)

    return out[:B, :out_dim]


def init_params(key, in_dim, out_dim, hidden=64):
    """PyTorch nn.Linear-style init (uniform +/- 1/sqrt(fan_in)).
    Weights stored pre-transposed as [in_features, out_features], biases [1, out]."""
    ks = jax.random.split(key, 6)

    def linear(kw, kb, fan_in, fan_out):
        bound = 1.0 / jnp.sqrt(float(fan_in))
        w = jax.random.uniform(kw, (fan_in, fan_out), jnp.float32, -bound, bound)
        b = jax.random.uniform(kb, (1, fan_out), jnp.float32, -bound, bound)
        return w, b

    w1, b1 = linear(ks[0], ks[1], in_dim, hidden)
    w2, b2 = linear(ks[2], ks[3], hidden, hidden)
    w3, b3 = linear(ks[4], ks[5], hidden, out_dim)
    return {"w1": w1, "b1": b1, "w2": w2, "b2": b2, "w3": w3, "b3": b3}


def _reference_f32(obs, p):
    h1 = jnp.maximum(obs @ p["w1"] + p["b1"], 0.0)
    h2 = jnp.maximum(h1 @ p["w2"] + p["b2"], 0.0)
    return h2 @ p["w3"] + p["b3"]


def _reference_bf16(obs, p):
    # Mirrors the kernel's dtype strategy (bf16 operands, f32 accumulate).
    x = obs.astype(jnp.bfloat16)
    h1 = jnp.dot(x, p["w1"].astype(jnp.bfloat16),
                 preferred_element_type=jnp.float32) + p["b1"]
    h1 = jnp.maximum(h1, 0.0).astype(jnp.bfloat16)
    h2 = jnp.dot(h1, p["w2"].astype(jnp.bfloat16),
                 preferred_element_type=jnp.float32) + p["b2"]
    h2 = jnp.maximum(h2, 0.0).astype(jnp.bfloat16)
    return jnp.dot(h2, p["w3"].astype(jnp.bfloat16),
                   preferred_element_type=jnp.float32) + p["b3"]


if __name__ == "__main__":
    key = jax.random.PRNGKey(0)
    k_obs, k_obs2, k_params = jax.random.split(key, 3)

    B, in_dim, out_dim = 8, 16, 4
    obs = jax.random.normal(k_obs, (B, in_dim), jnp.float32)
    params = init_params(k_params, in_dim, out_dim)

    # Single-tile case.
    out = jax.block_until_ready(feedforward_nn(obs, params))
    assert out.shape == (B, out_dim)
    assert jnp.allclose(out, _reference_bf16(obs, params), atol=5e-3, rtol=5e-3)
    assert jnp.allclose(out, _reference_f32(obs, params), atol=5e-2, rtol=5e-2)

    # Multi-step grid + batch padding case (tb_max=16 -> grid of 3, B padded 40->48).
    obs2 = jax.random.normal(k_obs2, (40, in_dim), jnp.float32)
    out2 = jax.block_until_ready(feedforward_nn(obs2, params, tb_max=16))
    assert out2.shape == (40, out_dim)
    assert jnp.allclose(out2, _reference_bf16(obs2, params), atol=5e-3, rtol=5e-3)

    print("KERNEL_OK")
</pallas_src>

<mosaic_0001>
module attributes {stable_mosaic.version = 11 : i64} {
  func.func @_mlp_kernel(%arg0: i32, %arg1: memref<8x16xbf16, #tpu.memory_space<vmem>>, %arg2: memref<16x64xbf16, #tpu.memory_space<vmem>>, %arg3: memref<1x64xf32, #tpu.memory_space<vmem>>, %arg4: memref<64x64xbf16, #tpu.memory_space<vmem>>, %arg5: memref<1x64xf32, #tpu.memory_space<vmem>>, %arg6: memref<64x128xbf16, #tpu.memory_space<vmem>>, %arg7: memref<1x128xf32, #tpu.memory_space<vmem>>, %arg8: memref<8x128xf32, #tpu.memory_space<vmem>>) attributes {dimension_semantics = [#tpu.dimension_semantics<parallel>], iteration_bounds = array<i64: 1>, scalar_prefetch = 0 : i64, scratch_operands = 0 : i64, tpu.core_type = #tpu.core_type<tc>, window_params = [{transform_indices = @transform_0, window_bounds = array<i64: 8, 16>}, {pipeline_mode = #tpu.pipeline_mode<synchronous>, transform_indices = @transform_1, window_bounds = array<i64: 16, 64>}, {pipeline_mode = #tpu.pipeline_mode<synchronous>, transform_indices = @transform_2, window_bounds = array<i64: 1, 64>}, {pipeline_mode = #tpu.pipeline_mode<synchronous>, transform_indices = @transform_3, window_bounds = array<i64: 64, 64>}, {pipeline_mode = #tpu.pipeline_mode<synchronous>, transform_indices = @transform_4, window_bounds = array<i64: 1, 64>}, {pipeline_mode = #tpu.pipeline_mode<synchronous>, transform_indices = @transform_5, window_bounds = array<i64: 64, 128>}, {pipeline_mode = #tpu.pipeline_mode<synchronous>, transform_indices = @transform_6, window_bounds = array<i64: 1, 128>}, {transform_indices = @transform_7, window_bounds = array<i64: 8, 128>}]} {
    %c0 = arith.constant 0 : index
    %c0_0 = arith.constant 0 : index
    %0 = vector.load %arg1[%c0, %c0_0] : memref<8x16xbf16, #tpu.memory_space<vmem>>, vector<8x16xbf16>
    %c0_1 = arith.constant 0 : index
    %c0_2 = arith.constant 0 : index
    %1 = vector.load %arg2[%c0_1, %c0_2] : memref<16x64xbf16, #tpu.memory_space<vmem>>, vector<16x64xbf16>
    %cst = arith.constant dense<0.000000e+00> : vector<8x64xf32>
    %2 = tpu.matmul %0, %1, %cst {dimension_numbers = #tpu.dot_dimension_numbers<[1], [0], [0], [1], [0, 0, 1, 1], [], []>} : vector<8x16xbf16>, vector<16x64xbf16>, vector<8x64xf32> -> vector<8x64xf32>
    %c0_3 = arith.constant 0 : index
    %c0_4 = arith.constant 0 : index
    %3 = vector.load %arg3[%c0_3, %c0_4] : memref<1x64xf32, #tpu.memory_space<vmem>>, vector<1x64xf32>
    %4 = vector.broadcast %3 : vector<1x64xf32> to vector<8x64xf32>
    %5 = arith.addf %2, %4 : vector<8x64xf32>
    %cst_5 = arith.constant 0.000000e+00 : f32
    %6 = vector.broadcast %cst_5 : f32 to vector<8x64xf32>
    %7 = arith.maximumf %5, %6 : vector<8x64xf32>
    %8 = arith.truncf %7 : vector<8x64xf32> to vector<8x64xbf16>
    %c0_6 = arith.constant 0 : index
    %c0_7 = arith.constant 0 : index
    %9 = vector.load %arg4[%c0_6, %c0_7] : memref<64x64xbf16, #tpu.memory_space<vmem>>, vector<64x64xbf16>
    %cst_8 = arith.constant dense<0.000000e+00> : vector<8x64xf32>
    %10 = tpu.matmul %8, %9, %cst_8 {dimension_numbers = #tpu.dot_dimension_numbers<[1], [0], [0], [1], [0, 0, 1, 1], [], []>} : vector<8x64xbf16>, vector<64x64xbf16>, vector<8x64xf32> -> vector<8x64xf32>
    %c0_9 = arith.constant 0 : index
    %c0_10 = arith.constant 0 : index
    %11 = vector.load %arg5[%c0_9, %c0_10] : memref<1x64xf32, #tpu.memory_space<vmem>>, vector<1x64xf32>
    %12 = vector.broadcast %11 : vector<1x64xf32> to vector<8x64xf32>
    %13 = arith.addf %10, %12 : vector<8x64xf32>
    %cst_11 = arith.constant 0.000000e+00 : f32
    %14 = vector.broadcast %cst_11 : f32 to vector<8x64xf32>
    %15 = arith.maximumf %13, %14 : vector<8x64xf32>
    %16 = arith.truncf %15 : vector<8x64xf32> to vector<8x64xbf16>
    %c0_12 = arith.constant 0 : index
    %c0_13 = arith.constant 0 : index
    %17 = vector.load %arg6[%c0_12, %c0_13] : memref<64x128xbf16, #tpu.memory_space<vmem>>, vector<64x128xbf16>
    %cst_14 = arith.constant dense<0.000000e+00> : vector<8x128xf32>
    %18 = tpu.matmul %16, %17, %cst_14 {dimension_numbers = #tpu.dot_dimension_numbers<[1], [0], [0], [1], [0, 0, 1, 1], [], []>} : vector<8x64xbf16>, vector<64x128xbf16>, vector<8x128xf32> -> vector<8x128xf32>
    %c0_15 = arith.constant 0 : index
    %c0_16 = arith.constant 0 : index
    %19 = vector.load %arg7[%c0_15, %c0_16] : memref<1x128xf32, #tpu.memory_space<vmem>>, vector<1x128xf32>
    %20 = vector.broadcast %19 : vector<1x128xf32> to vector<8x128xf32>
    %21 = arith.addf %18, %20 : vector<8x128xf32>
    %c0_17 = arith.constant 0 : index
    %c0_18 = arith.constant 0 : index
    %22 = vector.load %arg8[%c0_17, %c0_18] : memref<8x128xf32, #tpu.memory_space<vmem>>, vector<8x128xf32>
    tpu.vector_store %arg8[%c0_17, %c0_18], %21 {strides = array<i32>} : memref<8x128xf32, #tpu.memory_space<vmem>>, vector<8x128xf32>,
    return
  }
  func.func @transform_0(%arg0: i32) -> (i32, i32) {
    %c0_i32 = arith.constant 0 : i32
    %c0_i32_0 = arith.constant 0 : i32
    return %arg0, %c0_i32 : i32, i32
  }
  func.func @transform_1(%arg0: i32) -> (i32, i32) {
    %c0_i32 = arith.constant 0 : i32
    %c0_i32_0 = arith.constant 0 : i32
    %c0_i32_1 = arith.constant 0 : i32
    return %c0_i32, %c0_i32_0 : i32, i32
  }
  func.func @transform_2(%arg0: i32) -> (i32, i32) {
    %c0_i32 = arith.constant 0 : i32
    %c0_i32_0 = arith.constant 0 : i32
    %c0_i32_1 = arith.constant 0 : i32
    return %c0_i32, %c0_i32_0 : i32, i32
  }
  func.func @transform_3(%arg0: i32) -> (i32, i32) {
    %c0_i32 = arith.constant 0 : i32
    %c0_i32_0 = arith.constant 0 : i32
    %c0_i32_1 = arith.constant 0 : i32
    return %c0_i32, %c0_i32_0 : i32, i32
  }
  func.func @transform_4(%arg0: i32) -> (i32, i32) {
    %c0_i32 = arith.constant 0 : i32
    %c0_i32_0 = arith.constant 0 : i32
    %c0_i32_1 = arith.constant 0 : i32
    return %c0_i32, %c0_i32_0 : i32, i32
  }
  func.func @transform_5(%arg0: i32) -> (i32, i32) {
    %c0_i32 = arith.constant 0 : i32
    %c0_i32_0 = arith.constant 0 : i32
    %c0_i32_1 = arith.constant 0 : i32
    return %c0_i32, %c0_i32_0 : i32, i32
  }
  func.func @transform_6(%arg0: i32) -> (i32, i32) {
    %c0_i32 = arith.constant 0 : i32
    %c0_i32_0 = arith.constant 0 : i32
    %c0_i32_1 = arith.constant 0 : i32
    return %c0_i32, %c0_i32_0 : i32, i32
  }
  func.func @transform_7(%arg0: i32) -> (i32, i32) {
    %c0_i32 = arith.constant 0 : i32
    %c0_i32_0 = arith.constant 0 : i32
    return %arg0, %c0_i32 : i32, i32
  }
}

</mosaic_0001>

<llo_original>
// kernel: feedforward_nn.1
$region0: #{feedforward_nn.1}
  #allocation0 [shape = 'u32[]', space=smem, size = 0x4, offset = 0x4, fixed_abs, tag = 'smem constant byte address 0x4 - core index']
  #allocation1 [shape = 'u32[144,128]{1,0:T(1,128)}', space=vmem, size = 0x12000, scoped, tag = 'internal scratch']
  %s0 = inlined_call_operand.vmem [shape: bf16[8,16], index: 0, kind: input, shape index: {}]
  %s1 = inlined_call_operand.vmem [shape: bf16[16,64], index: 1, kind: input, shape index: {}]
  %s2 = inlined_call_operand.vmem [shape: f32[1,64], index: 2, kind: input, shape index: {}]
  %s3 = inlined_call_operand.vmem [shape: bf16[64,64], index: 3, kind: input, shape index: {}]
  %s4 = inlined_call_operand.vmem [shape: f32[1,64], index: 4, kind: input, shape index: {}]
  %s5 = inlined_call_operand.vmem [shape: bf16[64,128], index: 5, kind: input, shape index: {}]
  %s6 = inlined_call_operand.vmem [shape: f32[1,128], index: 6, kind: input, shape index: {}]
  %s7 = inlined_call_operand.vmem [shape: f32[8,128], index: 7, kind: output, shape index: {}]
  %s8 = sld [smem:[#allocation0]]
  $region38: #{feedforward_nn.1} parent=0
    _
  %s10 = ssub.s32 1, %s8
  %s11 = scalar_select 0, %s10, %s8
  // Predicated region
  $region2: #{feedforward_nn.1} parent=0 // pred_check
    _
  $region3: #{feedforward_nn.1} parent=0 // pred_check_branch
    %13 = sbr.rel (0) target = $region5
  $region4: #{feedforward_nn.1} parent=0 // pred_region
    _
  $region5: #{feedforward_nn.1} parent=0 // pred_fallthru
    _
  // Predicated region
  $region6: #{feedforward_nn.1} parent=0 // pred_check
    _
  $region7: #{feedforward_nn.1} parent=0 // pred_check_branch
    %15 = sbr.rel (0) target = $region9
  $region8: #{feedforward_nn.1} parent=0 // pred_region
    _
  $region9: #{feedforward_nn.1} parent=0 // pred_fallthru
    _
  // Predicated region
  $region10: #{feedforward_nn.1} parent=0 // pred_check
    _
  $region11: #{feedforward_nn.1} parent=0 // pred_check_branch
    %17 = sbr.rel (0) target = $region13
  $region12: #{feedforward_nn.1} parent=0 // pred_region
    _
  $region13: #{feedforward_nn.1} parent=0 // pred_fallthru
    _
  // Predicated region
  $region14: #{feedforward_nn.1} parent=0 // pred_check
    _
  $region15: #{feedforward_nn.1} parent=0 // pred_check_branch
    %19 = sbr.rel (0) target = $region17
  $region16: #{feedforward_nn.1} parent=0 // pred_region
    _
  $region17: #{feedforward_nn.1} parent=0 // pred_fallthru
    _
  // Predicated region
  $region18: #{feedforward_nn.1} parent=0 // pred_check
    _
  $region19: #{feedforward_nn.1} parent=0 // pred_check_branch
    %21 = sbr.rel (0) target = $region21
  $region20: #{feedforward_nn.1} parent=0 // pred_region
    _
  $region21: #{feedforward_nn.1} parent=0 // pred_fallthru
    _
  // Predicated region
  $region22: #{feedforward_nn.1} parent=0 // pred_check
    _
  $region23: #{feedforward_nn.1} parent=0 // pred_check_branch
    %23 = sbr.rel (0) target = $region25
  $region24: #{feedforward_nn.1} parent=0 // pred_region
    _
  $region25: #{feedforward_nn.1} parent=0 // pred_fallthru
    _
  // Predicated region
  $region26: #{feedforward_nn.1} parent=0 // pred_check
    _
  $region27: #{feedforward_nn.1} parent=0 // pred_check_branch
    %25 = sbr.rel (0) target = $region29
  $region28: #{feedforward_nn.1} parent=0 // pred_region
    _
  $region29: #{feedforward_nn.1} parent=0 // pred_fallthru
    _
  %v27 = vld [vmem:[%s0] sm:$0xf]
  %v28 = vld [vmem:[%s1] sm:$0xf]
  %v29 = vld [vmem:[%s1 + $0x4] sm:$0xf]
  %v30 = vld [vmem:[%s2] sm:$0x1]
  %v32 = vlaneseq
  %v33 = vshrl.u32 %v32, 7
  %v34 = vsub.s32 0, %v33
  %v35 = vrot.slane %v30, %v34
  %v39 = vunpack.c.l.b16 %v28
  %v40 = vunpack.c.l.b16 %v29
  %v41 = vpack.c.b16 %v40, %v39
  %vm43 = vcmask 130048
  %v45 = vsel %vm43, %v27, 0
  %47 = vmatprep.subr.bf16.mxu0 0
  %48 = vmatpush1.bf16.msra.mxu0 %v41
  %49 = vmatprep.subr.bf16.mxu0 0
  %50 = vmatpush1.bf16.msra.mxu0 0
  %51 = vmatprep.subr.bf16.mxu0 0
  %52 = vmatpush1.bf16.msra.mxu0 0
  %53 = vmatprep.subr.bf16.mxu0 0
  %54 = vmatpush1.bf16.msra.mxu0 0
  %55 = vmatprep.subr.bf16.mxu0 0
  %56 = vmatpush1.bf16.msra.mxu0 0
  %57 = vmatprep.subr.bf16.mxu0 0
  %58 = vmatpush1.bf16.msra.mxu0 0
  %59 = vmatprep.subr.bf16.mxu0 0
  %60 = vmatpush1.bf16.msra.mxu0 0
  %61 = vmatprep.subr.bf16.mxu0 0
  %62 = vmatpush1.bf16.msra.mxu0 0
  %63 = vmatprep.subr.bf16.mxu0 0
  %64 = vmatpush1.bf16.msra.mxu0 0
  %65 = vmatprep.subr.bf16.mxu0 0
  %66 = vmatpush1.bf16.msra.mxu0 0
  %67 = vmatprep.subr.bf16.mxu0 0
  %68 = vmatpush1.bf16.msra.mxu0 0
  %69 = vmatprep.subr.bf16.mxu0 0
  %70 = vmatpush1.bf16.msra.mxu0 0
  %71 = vmatprep.subr.bf16.mxu0 0
  %72 = vmatpush1.bf16.msra.mxu0 0
  %73 = vmatprep.subr.bf16.mxu0 0
  %74 = vmatpush1.bf16.msra.mxu0 0
  %75 = vmatprep.subr.bf16.mxu0 0
  %76 = vmatpush1.bf16.msra.mxu0 0
  %77 = vmatprep.subr.bf16.mxu0 0
  %78 = vmatpush1.bf16.msra.mxu0 0
  %79 = vmatprep.mubr.bf16.mxu0 0
  %80 = vmatmul.mubr.bf16.gmra.mrb[0].mxu0 %v45
  %v81 = vpop.f32.mrb[0].mxu0
  %v82 = vadd.f32 %v35, %v81
  %v83 = vpop.f32.mrb[0].mxu0
  %v84 = vpop.f32.mrb[0].mxu0
  %v85 = vpop.f32.mrb[0].mxu0
  %86 = vdwg.mxu0
  %v87 = vmax.f32 %v82, 0.0
  %v88 = vpack.c.bf16 %v87, %v87
  %v89 = vld [vmem:[%s3] sm:$0xf]
  %v90 = vld [vmem:[%s3 + $0x4] sm:$0xf]
  %v91 = vld [vmem:[%s3 + $0x8] sm:$0xf]
  %v92 = vld [vmem:[%s3 + $0xc] sm:$0xf]
  %v93 = vld [vmem:[%s3 + $0x10] sm:$0xf]
  %v94 = vld [vmem:[%s3 + $0x14] sm:$0xf]
  %v95 = vld [vmem:[%s3 + $0x18] sm:$0xf]
  %v96 = vld [vmem:[%s3 + $0x1c] sm:$0xf]
  %v97 = vld [vmem:[%s4] sm:$0x1]
  %v99 = vlaneseq
  %v100 = vshrl.u32 %v99, 7
  %v101 = vsub.s32 0, %v100
  %v102 = vrot.slane %v97, %v101
  %v112 = vunpack.c.l.b16 %v89
  %v113 = vunpack.c.l.b16 %v90
  %v114 = vunpack.c.l.b16 %v91
  %v115 = vunpack.c.l.b16 %v92
  %v116 = vunpack.c.l.b16 %v93
  %v117 = vunpack.c.l.b16 %v94
  %v118 = vunpack.c.l.b16 %v95
  %v119 = vunpack.c.l.b16 %v96
  %v120 = vpack.c.b16 %v113, %v112
  %v121 = vpack.c.b16 %v115, %v114
  %v122 = vpack.c.b16 %v117, %v116
  %v123 = vpack.c.b16 %v119, %v118
  %vm128 = vcmask 523264
  %v130 = vsel %vm128, %v88, 0
  %132 = vmatprep.subr.bf16.mxu0 0
  %133 = vmatpush1.bf16.msra.mxu0 %v120
  %134 = vmatprep.subr.bf16.mxu0 0
  %135 = vmatpush1.bf16.msra.mxu0 %v121
  %136 = vmatprep.subr.bf16.mxu0 0
  %137 = vmatpush1.bf16.msra.mxu0 %v122
  %138 = vmatprep.subr.bf16.mxu0 0
  %139 = vmatpush1.bf16.msra.mxu0 %v123
  %140 = vmatprep.subr.bf16.mxu0 0
  %141 = vmatpush1.bf16.msra.mxu0 0
  %142 = vmatprep.subr.bf16.mxu0 0
  %143 = vmatpush1.bf16.msra.mxu0 0
  %144 = vmatprep.subr.bf16.mxu0 0
  %145 = vmatpush1.bf16.msra.mxu0 0
  %146 = vmatprep.subr.bf16.mxu0 0
  %147 = vmatpush1.bf16.msra.mxu0 0
  %148 = vmatprep.subr.bf16.mxu0 0
  %149 = vmatpush1.bf16.msra.mxu0 0
  %150 = vmatprep.subr.bf16.mxu0 0
  %151 = vmatpush1.bf16.msra.mxu0 0
  %152 = vmatprep.subr.bf16.mxu0 0
  %153 = vmatpush1.bf16.msra.mxu0 0
  %154 = vmatprep.subr.bf16.mxu0 0
  %155 = vmatpush1.bf16.msra.mxu0 0
  %156 = vmatprep.subr.bf16.mxu0 0
  %157 = vmatpush1.bf16.msra.mxu0 0
  %158 = vmatprep.subr.bf16.mxu0 0
  %159 = vmatpush1.bf16.msra.mxu0 0
  %160 = vmatprep.subr.bf16.mxu0 0
  %161 = vmatpush1.bf16.msra.mxu0 0
  %162 = vmatprep.subr.bf16.mxu0 0
  %163 = vmatpush1.bf16.msra.mxu0 0
  %164 = vmatprep.mubr.bf16.mxu0 0
  %165 = vmatmul.mubr.bf16.gmra.mrb[0].mxu0 %v130
  %v166 = vpop.f32.mrb[0].mxu0
  %v167 = vadd.f32 %v102, %v166
  %v168 = vpop.f32.mrb[0].mxu0
  %v169 = vpop.f32.mrb[0].mxu0
  %v170 = vpop.f32.mrb[0].mxu0
  %171 = vdwg.mxu0
  %v172 = vmax.f32 %v167, 0.0
  %v173 = vpack.c.bf16 %v172, %v172
  %v174 = vld [vmem:[%s5] sm:$0xf]
  %v175 = vld [vmem:[%s5 + $0x4] sm:$0xf]
  %v176 = vld [vmem:[%s5 + $0x8] sm:$0xf]
  %v177 = vld [vmem:[%s5 + $0xc] sm:$0xf]
  %v178 = vld [vmem:[%s5 + $0x10] sm:$0xf]
  %v179 = vld [vmem:[%s5 + $0x14] sm:$0xf]
  %v180 = vld [vmem:[%s5 + $0x18] sm:$0xf]
  %v181 = vld [vmem:[%s5 + $0x1c] sm:$0xf]
  %v182 = vld [vmem:[%s6] sm:$0x1]
  %v184 = vlaneseq
  %v185 = vshrl.u32 %v184, 7
  %v186 = vsub.s32 0, %v185
  %v187 = vrot.slane %v182, %v186
  %v197 = vunpack.c.l.b16 %v174
  %v198 = vunpack.c.l.b16 %v175
  %v199 = vunpack.c.l.b16 %v176
  %v200 = vunpack.c.l.b16 %v177
  %v201 = vunpack.c.l.b16 %v178
  %v202 = vunpack.c.l.b16 %v179
  %v203 = vunpack.c.l.b16 %v180
  %v204 = vunpack.c.l.b16 %v181
  %v205 = vpack.c.b16 %v198, %v197
  %v206 = vpack.c.b16 %v200, %v199
  %v207 = vpack.c.b16 %v202, %v201
  %v208 = vpack.c.b16 %v204, %v203
  %v214 = vsel %vm128, %v173, 0
  %216 = vmatprep.subr.bf16.mxu0 0
  %217 = vmatpush1.bf16.msra.mxu0 %v205
  %218 = vmatprep.subr.bf16.mxu0 0
  %219 = vmatpush1.bf16.msra.mxu0 %v206
  %220 = vmatprep.subr.bf16.mxu0 0
  %221 = vmatpush1.bf16.msra.mxu0 %v207
  %222 = vmatprep.subr.bf16.mxu0 0
  %223 = vmatpush1.bf16.msra.mxu0 %v208
  %224 = vmatprep.subr.bf16.mxu0 0
  %225 = vmatpush1.bf16.msra.mxu0 0
  %226 = vmatprep.subr.bf16.mxu0 0
  %227 = vmatpush1.bf16.msra.mxu0 0
  %228 = vmatprep.subr.bf16.mxu0 0
  %229 = vmatpush1.bf16.msra.mxu0 0
  %230 = vmatprep.subr.bf16.mxu0 0
  %231 = vmatpush1.bf16.msra.mxu0 0
  %232 = vmatprep.subr.bf16.mxu0 0
  %233 = vmatpush1.bf16.msra.mxu0 0
  %234 = vmatprep.subr.bf16.mxu0 0
  %235 = vmatpush1.bf16.msra.mxu0 0
  %236 = vmatprep.subr.bf16.mxu0 0
  %237 = vmatpush1.bf16.msra.mxu0 0
  %238 = vmatprep.subr.bf16.mxu0 0
  %239 = vmatpush1.bf16.msra.mxu0 0
  %240 = vmatprep.subr.bf16.mxu0 0
  %241 = vmatpush1.bf16.msra.mxu0 0
  %242 = vmatprep.subr.bf16.mxu0 0
  %243 = vmatpush1.bf16.msra.mxu0 0
  %244 = vmatprep.subr.bf16.mxu0 0
  %245 = vmatpush1.bf16.msra.mxu0 0
  %246 = vmatprep.subr.bf16.mxu0 0
  %247 = vmatpush1.bf16.msra.mxu0 0
  %248 = vmatprep.mubr.bf16.mxu0 0
  %249 = vmatmul.mubr.bf16.gmra.mrb[0].mxu0 %v214
  %v250 = vpop.f32.mrb[0].mxu0
  %v251 = vadd.f32 %v187, %v250
  %v252 = vpop.f32.mrb[0].mxu0
  %v253 = vpop.f32.mrb[0].mxu0
  %v254 = vpop.f32.mrb[0].mxu0
  %255 = vdwg.mxu0
  %256 = vst [vmem:[%s7] sm:$0xff] %v251
  // Predicated region
  $region30: #{feedforward_nn.1} parent=0 // pred_check
    _
  $region31: #{feedforward_nn.1} parent=0 // pred_check_branch
    %258 = sbr.rel (0) target = $region33
  $region32: #{feedforward_nn.1} parent=0 // pred_region
    _
  $region33: #{feedforward_nn.1} parent=0 // pred_fallthru
    _
  // Predicated region
  $region34: #{feedforward_nn.1} parent=0 // pred_check
    _
  $region35: #{feedforward_nn.1} parent=0 // pred_check_branch
    %260 = sbr.rel (0) target = $region37
  $region36: #{feedforward_nn.1} parent=0 // pred_region
    _
  $region37: #{feedforward_nn.1} parent=0 // pred_fallthru
    _

</llo_original>
